<compile_context>
chip_gen: v7x
topology: tpu7x:2x2x1
jax: 0.10.0
libtpu: 0.0.40
codegen_flags: <defaults>
</compile_context>

<pallas_src>
from functools import partial

import jax
import jax.numpy as jnp
import numpy as np
from jax.experimental import pallas as pl
from jax.experimental.pallas import tpu as pltpu


def fused_kernel(x_ref, w1_ref, wab_ref, b2_ref, o_ref):
    """One block of slab-rows, fully fused, all operands 2-D and lane-dense.

    x_ref  : (R, Wo*4)        rows=(slab, out-row i), lanes=(out-col j, in-ch c);
                              channel 3 is an indicator carrying the conv1 bias
                              and zeroing padded pixels.
    w1_ref : (Wo*4, Wo*32)    block-diagonal conv1x1 weight (+bias row) per col j.
    wab_ref: (2*Wo*32, Wo*16) stacked taps: rows [0:Wo*32]   = (kh=0, kw=0/1),
                                            rows [Wo*32: ]   = (kh=1, kw=0/1);
                              kw shift baked into (super)diagonal blocks.
    b2_ref : (1, Wo*16)       conv-transpose bias tiled over j.
    o_ref  : (R, Wo*16)
    """
    # Stage 1: pointwise conv (1x1x1) + ReLU.  Indicator channel => padded
    # rows/cols come out exactly zero (relu(0*w + 0*b) == 0).
    v = jnp.maximum(
        jnp.dot(x_ref[...], w1_ref[...], preferred_element_type=jnp.float32),
        0.0)

    # Stage 2: transpose-conv.  kh=1 taps need v from the previous output row.
    # In-register sublane shift: v_up[i] = v[i-1]; the wrap-around row is the
    # block's last row, which is a slab's zero-padded output row, so v there
    # is exactly 0 and no masking is needed.
    v_up = pltpu.roll(v, shift=1, axis=0)

    # Both tap groups in a single K = 2*Wo*32 matmul; bias added once (hoisted).
    acc = b2_ref[...] + jnp.dot(
        jnp.concatenate([v, v_up], axis=1), wab_ref[...],
        preferred_element_type=jnp.float32)
    o_ref[...] = jnp.maximum(acc, 0.0)


def pack_params(params, H, W):
    """Pack weights for the fused kernel.  Depends only on params + (H, W):
    compute ONCE, outside the per-call forward path."""
    w1, b1, w2, b2 = params          # (3,32) (32,) (2,2,32,16) (16,)
    Ci, Cmid = w1.shape
    Co = w2.shape[-1]
    Wo = W + 1

    # conv1 weight (+bias as extra row), block-diagonal over output columns j.
    w1a = jnp.concatenate([w1, b1.reshape(1, Cmid)], axis=0)        # (Ci+1, Cmid)
    w1_bd = jnp.kron(jnp.eye(Wo, dtype=w1.dtype), w1a)              # (Wo*(Ci+1), Wo*Cmid)

    # Transpose-conv taps; column shift kw baked into (super)diagonal blocks,
    # kh=0 / kh=1 groups stacked along K for a single fused matmul.
    eye0 = jnp.eye(Wo, dtype=w2.dtype)
    eye1 = jnp.eye(Wo, k=1, dtype=w2.dtype)
    w_a = jnp.kron(eye0, w2[0, 0]) + jnp.kron(eye1, w2[0, 1])       # (Wo*Cmid, Wo*Co)
    w_b = jnp.kron(eye0, w2[1, 0]) + jnp.kron(eye1, w2[1, 1])       # (Wo*Cmid, Wo*Co)
    w_ab = jnp.concatenate([w_a, w_b], axis=0)                      # (2*Wo*Cmid, Wo*Co)

    b2_t = jnp.tile(b2.reshape(1, Co), (1, Wo))                     # (1, Wo*Co)
    return w1_bd, w_ab, b2_t


def _num_parallel_blocks(B2, Ho):
    """2-way 'parallel' grid split only on 2-TensorCore chips (v7x); on
    single-TC v5e/v6e one fat step is strictly better."""
    try:
        kind = jax.devices()[0].device_kind.lower()
    except Exception:  # pragma: no cover - be conservative if query fails
        kind = ""
    two_tc = "v7" in kind or "7x" in kind
    rows_half = (B2 // 2) * Ho
    if two_tc and B2 % 2 == 0 and rows_half % 8 == 0:
        # Block boundary falls on whole slabs (needed for the roll-based row
        # shift) and stays sublane-aligned.
        return 2
    return 1


@partial(jax.jit, static_argnames=("n_blocks",))
def model_forward(x1, packed, n_blocks=1):
    w1_bd, w_ab, b2_t = packed
    N, Ci, D, H, W = x1.shape
    B2 = N * D
    Ho, Wo = H + 1, W + 1
    lane_in = Wo * (Ci + 1)
    lane_mid = w_ab.shape[0] // 2
    lane_out = w_ab.shape[1]
    Co = lane_out // Wo

    # ---------- XLA-side activation packing (layout glue only) ----------
    # Channels-last, zero-padded to the output grid, plus an indicator channel
    # (1 on valid pixels) that carries the conv1 bias.
    # (Transposes kept only to preserve the module's NCHW I/O layout.)
    xc = jnp.transpose(x1, (0, 2, 3, 4, 1)).reshape(B2, H, W, Ci)
    ones = jnp.ones((B2, H, W, 1), xc.dtype)
    x_aug = jnp.concatenate([xc, ones], axis=-1)                 # (B2,H,W,Ci+1)
    x_aug = jnp.pad(x_aug, ((0, 0), (0, 1), (0, 1), (0, 0)))     # (B2,Ho,Wo,Ci+1)
    x_flat = x_aug.reshape(B2 * Ho, lane_in)                     # (rows, lanes)

    # ---------- fused Pallas call ----------
    rows = B2 * Ho
    rblk = rows // n_blocks

    out_flat = pl.pallas_call(
        fused_kernel,
        out_shape=jax.ShapeDtypeStruct((rows, lane_out), jnp.float32),
        grid=(n_blocks,),
        in_specs=[
            pl.BlockSpec((rblk, lane_in), lambda i: (i, 0)),
            pl.BlockSpec((lane_in, lane_mid), lambda i: (0, 0)),
            pl.BlockSpec((2 * lane_mid, lane_out), lambda i: (0, 0)),
            pl.BlockSpec((1, lane_out), lambda i: (0, 0)),
        ],
        out_specs=pl.BlockSpec((rblk, lane_out), lambda i: (i, 0)),
        compiler_params=pltpu.CompilerParams(dimension_semantics=("parallel",)),
    )(x_flat, w1_bd, w_ab, b2_t)

    out = out_flat.reshape(B2, Ho, Wo, Co)
    return jnp.transpose(out, (0, 3, 1, 2))                      # (B2, Co, Ho, Wo)


def reference(x1, w1, b1, w2, b2):
    """Pure-JAX reference (scatter-add form of the conv-transpose)."""
    N, Ci, D, H, W = x1.shape
    B2 = N * D
    xc = jnp.transpose(x1, (0, 2, 3, 4, 1)).reshape(B2, H, W, Ci)
    v = jnp.maximum(jnp.einsum("bhwc,cd->bhwd", xc, w1) + b1, 0.0)
    out = jnp.zeros((B2, H + 1, W + 1, w2.shape[-1]), jnp.float32) + b2
    for kh in range(2):
        for kw in range(2):
            out = out.at[:, kh:kh + H, kw:kw + W, :].add(
                jnp.einsum("bhwc,cd->bhwd", v, w2[kh, kw]))
    out = jnp.maximum(out, 0.0)
    return jnp.transpose(out, (0, 3, 1, 2))


if __name__ == "__main__":
    key = jax.random.PRNGKey(0)
    k1, k2, k3, k4, kx = jax.random.split(key, 5)

    # Deterministic parameter init (PyTorch-style uniform bounds, synthetic).
    # Conv3d(3, 32, 1): torch weight (32, 3, 1, 1, 1) -> stored transposed (3, 32).
    bound1 = 1.0 / np.sqrt(3.0)
    w1 = jax.random.uniform(k1, (3, 32), jnp.float32, -bound1, bound1)
    b1 = jax.random.uniform(k2, (32,), jnp.float32, -bound1, bound1)
    # ConvTranspose2d(32, 16, 2): torch weight (32, 16, 2, 2) -> stored (kh, kw, 32, 16).
    bound2 = 1.0 / np.sqrt(32.0 * 2 * 2)
    w2 = jax.random.uniform(k3, (2, 2, 32, 16), jnp.float32, -bound2, bound2)
    b2 = jax.random.uniform(k4, (16,), jnp.float32, -bound2, bound2)

    # Small input consistent with the module: (N, 3, D, H, W)
    x1 = jax.random.normal(kx, (2, 3, 4, 7, 7), jnp.float32)
    N, Ci, D, H, W = x1.shape

    # Param-only packing: computed once, outside the forward path.
    packed = pack_params((w1, b1, w2, b2), H, W)
    packed = jax.block_until_ready(packed)

    n_blocks = _num_parallel_blocks(N * D, H + 1)

    y = model_forward(x1, packed, n_blocks=n_blocks)
    y = jax.block_until_ready(y)

    y_ref = reference(x1, w1, b1, w2, b2)
    assert y.shape == (N * D, 16, H + 1, W + 1), y.shape
    np.testing.assert_allclose(np.asarray(y), np.asarray(y_ref), rtol=1e-4, atol=1e-4)

    print("KERNEL_OK")
</pallas_src>

<mosaic_0001>
module attributes {stable_mosaic.version = 11 : i64} {
  func.func @fused_kernel(%arg0: i32, %arg1: memref<64x32xf32, #tpu.memory_space<vmem>>, %arg2: memref<32x256xf32, #tpu.memory_space<vmem>>, %arg3: memref<512x128xf32, #tpu.memory_space<vmem>>, %arg4: memref<1x128xf32, #tpu.memory_space<vmem>>, %arg5: memref<64x128xf32, #tpu.memory_space<vmem>>) attributes {dimension_semantics = [#tpu.dimension_semantics<parallel>], iteration_bounds = array<i64: 1>, scalar_prefetch = 0 : i64, scratch_operands = 0 : i64, tpu.core_type = #tpu.core_type<tc>, window_params = [{transform_indices = @transform_0, window_bounds = array<i64: 64, 32>}, {pipeline_mode = #tpu.pipeline_mode<synchronous>, transform_indices = @transform_1, window_bounds = array<i64: 32, 256>}, {pipeline_mode = #tpu.pipeline_mode<synchronous>, transform_indices = @transform_2, window_bounds = array<i64: 512, 128>}, {pipeline_mode = #tpu.pipeline_mode<synchronous>, transform_indices = @transform_3, window_bounds = array<i64: 1, 128>}, {transform_indices = @transform_4, window_bounds = array<i64: 64, 128>}]} {
    %c0 = arith.constant 0 : index
    %c0_0 = arith.constant 0 : index
    %0 = vector.load %arg1[%c0, %c0_0] : memref<64x32xf32, #tpu.memory_space<vmem>>, vector<64x32xf32>
    %c0_1 = arith.constant 0 : index
    %c0_2 = arith.constant 0 : index
    %1 = vector.load %arg2[%c0_1, %c0_2] : memref<32x256xf32, #tpu.memory_space<vmem>>, vector<32x256xf32>
    %cst = arith.constant dense<0.000000e+00> : vector<64x256xf32>
    %2 = tpu.matmul %0, %1, %cst {dimension_numbers = #tpu.dot_dimension_numbers<[1], [0], [0], [1], [0, 0, 1, 1], [], []>} : vector<64x32xf32>, vector<32x256xf32>, vector<64x256xf32> -> vector<64x256xf32>
    %cst_3 = arith.constant 0.000000e+00 : f32
    %3 = vector.broadcast %cst_3 : f32 to vector<64x256xf32>
    %4 = arith.maximumf %2, %3 : vector<64x256xf32>
    %c1_i32 = arith.constant 1 : i32
    %5 = tpu.dynamic_rotate %4 by %c1_i32 dim 0 : vector<64x256xf32>, i32 -> vector<64x256xf32>
    %c0_4 = arith.constant 0 : index
    %c0_5 = arith.constant 0 : index
    %6 = vector.load %arg4[%c0_4, %c0_5] : memref<1x128xf32, #tpu.memory_space<vmem>>, vector<1x128xf32>
    %7 = tpu.concatenate %4, %5 in 1 : vector<64x256xf32>, vector<64x256xf32> -> vector<64x512xf32>
    %c0_6 = arith.constant 0 : index
    %c0_7 = arith.constant 0 : index
    %8 = vector.load %arg3[%c0_6, %c0_7] : memref<512x128xf32, #tpu.memory_space<vmem>>, vector<512x128xf32>
    %cst_8 = arith.constant dense<0.000000e+00> : vector<64x128xf32>
    %9 = tpu.matmul %7, %8, %cst_8 {dimension_numbers = #tpu.dot_dimension_numbers<[1], [0], [0], [1], [0, 0, 1, 1], [], []>} : vector<64x512xf32>, vector<512x128xf32>, vector<64x128xf32> -> vector<64x128xf32>
    %10 = vector.broadcast %6 : vector<1x128xf32> to vector<64x128xf32>
    %11 = arith.addf %10, %9 : vector<64x128xf32>
    %cst_9 = arith.constant 0.000000e+00 : f32
    %12 = vector.broadcast %cst_9 : f32 to vector<64x128xf32>
    %13 = arith.maximumf %11, %12 : vector<64x128xf32>
    %c0_10 = arith.constant 0 : index
    %c0_11 = arith.constant 0 : index
    %14 = vector.load %arg5[%c0_10, %c0_11] : memref<64x128xf32, #tpu.memory_space<vmem>>, vector<64x128xf32>
    tpu.vector_store %arg5[%c0_10, %c0_11], %13 {strides = array<i32>} : memref<64x128xf32, #tpu.memory_space<vmem>>, vector<64x128xf32>,
    return
  }
  func.func @transform_0(%arg0: i32) -> (i32, i32) {
    %c0_i32 = arith.constant 0 : i32
    %c0_i32_0 = arith.constant 0 : i32
    return %arg0, %c0_i32 : i32, i32
  }
  func.func @transform_1(%arg0: i32) -> (i32, i32) {
    %c0_i32 = arith.constant 0 : i32
    %c0_i32_0 = arith.constant 0 : i32
    %c0_i32_1 = arith.constant 0 : i32
    return %c0_i32, %c0_i32_0 : i32, i32
  }
  func.func @transform_2(%arg0: i32) -> (i32, i32) {
    %c0_i32 = arith.constant 0 : i32
    %c0_i32_0 = arith.constant 0 : i32
    %c0_i32_1 = arith.constant 0 : i32
    return %c0_i32, %c0_i32_0 : i32, i32
  }
  func.func @transform_3(%arg0: i32) -> (i32, i32) {
    %c0_i32 = arith.constant 0 : i32
    %c0_i32_0 = arith.constant 0 : i32
    %c0_i32_1 = arith.constant 0 : i32
    return %c0_i32, %c0_i32_0 : i32, i32
  }
  func.func @transform_4(%arg0: i32) -> (i32, i32) {
    %c0_i32 = arith.constant 0 : i32
    %c0_i32_0 = arith.constant 0 : i32
    return %arg0, %c0_i32 : i32, i32
  }
}

</mosaic_0001>

<llo_original>
// kernel: model_forward.1
$region0: #{model_forward.1}
  #allocation0 [shape = 'u32[]', space=smem, size = 0x4, offset = 0x4, fixed_abs, tag = 'smem constant byte address 0x4 - core index']
  #allocation1 [shape = 'u32[144,128]{1,0:T(1,128)}', space=vmem, size = 0x12000, scoped, tag = 'internal scratch']
  %s0 = inlined_call_operand.vmem [shape: f32[64,32], index: 0, kind: input, shape index: {}]
  %s1 = inlined_call_operand.vmem [shape: f32[32,256], index: 1, kind: input, shape index: {}]
  %s2 = inlined_call_operand.vmem [shape: f32[512,128], index: 2, kind: input, shape index: {}]
  %s3 = inlined_call_operand.vmem [shape: f32[1,128], index: 3, kind: input, shape index: {}]
  %s4 = inlined_call_operand.vmem [shape: f32[64,128], index: 4, kind: output, shape index: {}]
  %s5 = sld [smem:[#allocation0]]
  $region26: #{model_forward.1} parent=0
    _
  %s7 = ssub.s32 1, %s5
  %s8 = scalar_select 0, %s7, %s5
  // Predicated region
  $region2: #{model_forward.1} parent=0 // pred_check
    _
  $region3: #{model_forward.1} parent=0 // pred_check_branch
    %10 = sbr.rel (0) target = $region5
  $region4: #{model_forward.1} parent=0 // pred_region
    _
  $region5: #{model_forward.1} parent=0 // pred_fallthru
    _
  // Predicated region
  $region6: #{model_forward.1} parent=0 // pred_check
    _
  $region7: #{model_forward.1} parent=0 // pred_check_branch
    %12 = sbr.rel (0) target = $region9
  $region8: #{model_forward.1} parent=0 // pred_region
    _
  $region9: #{model_forward.1} parent=0 // pred_fallthru
    _
  // Predicated region
  $region10: #{model_forward.1} parent=0 // pred_check
    _
  $region11: #{model_forward.1} parent=0 // pred_check_branch
    %14 = sbr.rel (0) target = $region13
  $region12: #{model_forward.1} parent=0 // pred_region
    _
  $region13: #{model_forward.1} parent=0 // pred_fallthru
    _
  // Predicated region
  $region14: #{model_forward.1} parent=0 // pred_check
    _
  $region15: #{model_forward.1} parent=0 // pred_check_branch
    %16 = sbr.rel (0) target = $region17
  $region16: #{model_forward.1} parent=0 // pred_region
    _
  $region17: #{model_forward.1} parent=0 // pred_fallthru
    _
  %v17 = vld [vmem:[%s0] sm:$0xff]
  %v18 = vld [vmem:[%s0 + $0x8] sm:$0xff]
  %v19 = vld [vmem:[%s0 + $0x10] sm:$0xff]
  %v20 = vld [vmem:[%s0 + $0x18] sm:$0xff]
  %v21 = vld [vmem:[%s0 + $0x20] sm:$0xff]
  %v22 = vld [vmem:[%s0 + $0x28] sm:$0xff]
  %v23 = vld [vmem:[%s0 + $0x30] sm:$0xff]
  %v24 = vld [vmem:[%s0 + $0x38] sm:$0xff]
  %v25 = vld [vmem:[%s1] sm:$0xff]
  %v26 = vld [vmem:[%s1 + $0x8] sm:$0xff]
  %v27 = vld [vmem:[%s1 + $0x10] sm:$0xff]
  %v28 = vld [vmem:[%s1 + $0x18] sm:$0xff]
  %v29 = vld [vmem:[%s1 + $0x20] sm:$0xff]
  %v30 = vld [vmem:[%s1 + $0x28] sm:$0xff]
  %v31 = vld [vmem:[%s1 + $0x30] sm:$0xff]
  %v32 = vld [vmem:[%s1 + $0x38] sm:$0xff]
  %vm33 = vcmask 261120
  %v35 = vsel %vm33, %v17, 0
  %v38 = vsel %vm33, %v18, 0
  %v41 = vsel %vm33, %v19, 0
  %v44 = vsel %vm33, %v20, 0
  %v47 = vsel %vm33, %v21, 0
  %v50 = vsel %vm33, %v22, 0
  %v53 = vsel %vm33, %v23, 0
  %v56 = vsel %vm33, %v24, 0
  %58 = vmatprep.subr.mxu0 %v26
  %59 = vmatpush1.msra.mxu0 %v25
  %60 = vmatprep.subr.mxu0 %v28
  %61 = vmatpush1.msra.mxu0 %v27
  %62 = vmatprep.subr.mxu0 %v30
  %63 = vmatpush1.msra.mxu0 %v29
  %64 = vmatprep.subr.mxu0 %v32
  %65 = vmatpush1.msra.mxu0 %v31
  %66 = vmatprep.subr.mxu0 0.0
  %67 = vmatpush1.msra.mxu0 0.0
  %68 = vmatprep.subr.mxu0 0.0
  %69 = vmatpush1.msra.mxu0 0.0
  %70 = vmatprep.subr.mxu0 0.0
  %71 = vmatpush1.msra.mxu0 0.0
  %72 = vmatprep.subr.mxu0 0.0
  %73 = vmatpush1.msra.mxu0 0.0
  %74 = vmatprep.subr.mxu0 0.0
  %75 = vmatpush1.msra.mxu0 0.0
  %76 = vmatprep.subr.mxu0 0.0
  %77 = vmatpush1.msra.mxu0 0.0
  %78 = vmatprep.subr.mxu0 0.0
  %79 = vmatpush1.msra.mxu0 0.0
  %80 = vmatprep.subr.mxu0 0.0
  %81 = vmatpush1.msra.mxu0 0.0
  %82 = vmatprep.subr.mxu0 0.0
  %83 = vmatpush1.msra.mxu0 0.0
  %84 = vmatprep.subr.mxu0 0.0
  %85 = vmatpush1.msra.mxu0 0.0
  %86 = vmatprep.subr.mxu0 0.0
  %87 = vmatpush1.msra.mxu0 0.0
  %88 = vmatprep.subr.mxu0 0.0
  %89 = vmatpush1.msra.mxu0 0.0
  %90 = vmatprep.subr.mxu0 0.0
  %91 = vmatpush1.msra.mxu0 0.0
  %92 = vmatprep.subr.mxu0 0.0
  %93 = vmatpush1.msra.mxu0 0.0
  %94 = vmatprep.subr.mxu0 0.0
  %95 = vmatpush1.msra.mxu0 0.0
  %96 = vmatprep.subr.mxu0 0.0
  %97 = vmatpush1.msra.mxu0 0.0
  %98 = vmatprep.subr.mxu0 0.0
  %99 = vmatpush1.msra.mxu0 0.0
  %100 = vmatprep.subr.mxu0 0.0
  %101 = vmatpush1.msra.mxu0 0.0
  %102 = vmatprep.subr.mxu0 0.0
  %103 = vmatpush1.msra.mxu0 0.0
  %104 = vmatprep.subr.mxu0 0.0
  %105 = vmatpush1.msra.mxu0 0.0
  %106 = vmatprep.subr.mxu0 0.0
  %107 = vmatpush1.msra.mxu0 0.0
  %108 = vmatprep.subr.mxu0 0.0
  %109 = vmatpush1.msra.mxu0 0.0
  %110 = vmatprep.subr.mxu0 0.0
  %111 = vmatpush1.msra.mxu0 0.0
  %112 = vmatprep.subr.mxu0 0.0
  %113 = vmatpush1.msra.mxu0 0.0
  %114 = vmatprep.subr.mxu0 0.0
  %115 = vmatpush1.msra.mxu0 0.0
  %116 = vmatprep.subr.mxu0 0.0
  %117 = vmatpush1.msra.mxu0 0.0
  %118 = vmatprep.subr.mxu0 0.0
  %119 = vmatpush1.msra.mxu0 0.0
  %120 = vmatprep.subr.mxu0 0.0
  %121 = vmatpush1.msra.mxu0 0.0
  %122 = vmatprep.mubr.f32.mxu0 0.0
  %123 = vmatmul.mubr.f32.gmra.mrb[0].mxu0 %v35
  %v124 = vpop.f32.mrb[0].mxu0
  %v125 = vadd.f32 0.0, %v124
  %v126 = vpop.f32.mrb[0].mxu0
  %v127 = vadd.f32 0.0, %v126
  %128 = vmatprep.mubr.f32.mxu0 0.0
  %129 = vmatmul.mubr.f32.gmra.mrb[0].mxu0 %v38
  %v130 = vpop.f32.mrb[0].mxu0
  %v131 = vadd.f32 0.0, %v130
  %v132 = vpop.f32.mrb[0].mxu0
  %v133 = vadd.f32 0.0, %v132
  %134 = vmatprep.mubr.f32.mxu0 0.0
  %135 = vmatmul.mubr.f32.gmra.mrb[0].mxu0 %v41
  %v136 = vpop.f32.mrb[0].mxu0
  %v137 = vadd.f32 0.0, %v136
  %v138 = vpop.f32.mrb[0].mxu0
  %v139 = vadd.f32 0.0, %v138
  %140 = vmatprep.mubr.f32.mxu0 0.0
  %141 = vmatmul.mubr.f32.gmra.mrb[0].mxu0 %v44
  %v142 = vpop.f32.mrb[0].mxu0
  %v143 = vadd.f32 0.0, %v142
  %v144 = vpop.f32.mrb[0].mxu0
  %v145 = vadd.f32 0.0, %v144
  %146 = vmatprep.mubr.f32.mxu0 0.0
  %147 = vmatmul.mubr.f32.gmra.mrb[0].mxu0 %v47
  %v148 = vpop.f32.mrb[0].mxu0
  %v149 = vadd.f32 0.0, %v148
  %v150 = vpop.f32.mrb[0].mxu0
  %v151 = vadd.f32 0.0, %v150
  %152 = vmatprep.mubr.f32.mxu0 0.0
  %153 = vmatmul.mubr.f32.gmra.mrb[0].mxu0 %v50
  %v154 = vpop.f32.mrb[0].mxu0
  %v155 = vadd.f32 0.0, %v154
  %v156 = vpop.f32.mrb[0].mxu0
  %v157 = vadd.f32 0.0, %v156
  %158 = vmatprep.mubr.f32.mxu0 0.0
  %159 = vmatmul.mubr.f32.gmra.mrb[0].mxu0 %v53
  %v160 = vpop.f32.mrb[0].mxu0
  %v161 = vadd.f32 0.0, %v160
  %v162 = vpop.f32.mrb[0].mxu0
  %v163 = vadd.f32 0.0, %v162
  %164 = vmatprep.mubr.f32.mxu0 0.0
  %165 = vmatmul.mubr.f32.gmra.mrb[0].mxu0 %v56
  %v166 = vpop.f32.mrb[0].mxu0
  %v167 = vadd.f32 0.0, %v166
  %v168 = vpop.f32.mrb[0].mxu0
  %v169 = vadd.f32 0.0, %v168
  %170 = vdwg.mxu0
  %v171 = vmax.f32 %v125, 0.0
  %v172 = vmax.f32 %v127, 0.0
  %v173 = vmax.f32 %v131, 0.0
  %v174 = vmax.f32 %v133, 0.0
  %v175 = vmax.f32 %v137, 0.0
  %v176 = vmax.f32 %v139, 0.0
  %v177 = vmax.f32 %v143, 0.0
  %v178 = vmax.f32 %v145, 0.0
  %v179 = vmax.f32 %v149, 0.0
  %v180 = vmax.f32 %v151, 0.0
  %v181 = vmax.f32 %v155, 0.0
  %v182 = vmax.f32 %v157, 0.0
  %v183 = vmax.f32 %v161, 0.0
  %v184 = vmax.f32 %v163, 0.0
  %v185 = vmax.f32 %v167, 0.0
  %v186 = vmax.f32 %v169, 0.0
  %v187 = vrot.slane %v171, 7
  %v188 = vrot.slane %v172, 7
  %v189 = vrot.slane %v173, 7
  %v190 = vrot.slane %v174, 7
  %v191 = vrot.slane %v175, 7
  %v192 = vrot.slane %v176, 7
  %v193 = vrot.slane %v177, 7
  %v194 = vrot.slane %v178, 7
  %v195 = vrot.slane %v179, 7
  %v196 = vrot.slane %v180, 7
  %v197 = vrot.slane %v181, 7
  %v198 = vrot.slane %v182, 7
  %v199 = vrot.slane %v183, 7
  %v200 = vrot.slane %v184, 7
  %v201 = vrot.slane %v185, 7
  %v202 = vrot.slane %v186, 7
  %v203 = vlaneseq
  %v204 = vshrl.u32 %v203, 7
  %vm205 = vcmp.lt.s32.totalorder %v204, 1
  %v206 = vsel %vm205, %v199, %v201
  %v207 = vsel %vm205, %v200, %v202
  %v208 = vsel %vm205, %v197, %v199
  %v209 = vsel %vm205, %v198, %v200
  %v210 = vsel %vm205, %v195, %v197
  %v211 = vsel %vm205, %v196, %v198
  %v212 = vsel %vm205, %v193, %v195
  %v213 = vsel %vm205, %v194, %v196
  %v214 = vsel %vm205, %v191, %v193
  %v215 = vsel %vm205, %v192, %v194
  %v216 = vsel %vm205, %v189, %v191
  %v217 = vsel %vm205, %v190, %v192
  %v218 = vsel %vm205, %v187, %v189
  %v219 = vsel %vm205, %v188, %v190
  %v220 = vsel %vm205, %v201, %v187
  %v221 = vsel %vm205, %v202, %v188
  %v222 = vld [vmem:[%s3] sm:$0x1]
  %v223 = vld [vmem:[%s2] sm:$0xff]
  %v224 = vld [vmem:[%s2 + $0x8] sm:$0xff]
  %v225 = vld [vmem:[%s2 + $0x10] sm:$0xff]
  %v226 = vld [vmem:[%s2 + $0x18] sm:$0xff]
  %v227 = vld [vmem:[%s2 + $0x20] sm:$0xff]
  %v228 = vld [vmem:[%s2 + $0x28] sm:$0xff]
  %v229 = vld [vmem:[%s2 + $0x30] sm:$0xff]
  %v230 = vld [vmem:[%s2 + $0x38] sm:$0xff]
  %v231 = vld [vmem:[%s2 + $0x40] sm:$0xff]
  %v232 = vld [vmem:[%s2 + $0x48] sm:$0xff]
  %v233 = vld [vmem:[%s2 + $0x50] sm:$0xff]
  %v234 = vld [vmem:[%s2 + $0x58] sm:$0xff]
  %v235 = vld [vmem:[%s2 + $0x60] sm:$0xff]
  %v236 = vld [vmem:[%s2 + $0x68] sm:$0xff]
  %v237 = vld [vmem:[%s2 + $0x70] sm:$0xff]
  %v238 = vld [vmem:[%s2 + $0x78] sm:$0xff]
  %v239 = vld [vmem:[%s2 + $0x80] sm:$0xff]
  %v240 = vld [vmem:[%s2 + $0x88] sm:$0xff]
  %v241 = vld [vmem:[%s2 + $0x90] sm:$0xff]
  %v242 = vld [vmem:[%s2 + $0x98] sm:$0xff]
  %v243 = vld [vmem:[%s2 + $0xa0] sm:$0xff]
  %v244 = vld [vmem:[%s2 + $0xa8] sm:$0xff]
  %v245 = vld [vmem:[%s2 + $0xb0] sm:$0xff]
  %v246 = vld [vmem:[%s2 + $0xb8] sm:$0xff]
  %v247 = vld [vmem:[%s2 + $0xc0] sm:$0xff]
  %v248 = vld [vmem:[%s2 + $0xc8] sm:$0xff]
  %v249 = vld [vmem:[%s2 + $0xd0] sm:$0xff]
  %v250 = vld [vmem:[%s2 + $0xd8] sm:$0xff]
  %v251 = vld [vmem:[%s2 + $0xe0] sm:$0xff]
  %v252 = vld [vmem:[%s2 + $0xe8] sm:$0xff]
  %v253 = vld [vmem:[%s2 + $0xf0] sm:$0xff]
  %v254 = vld [vmem:[%s2 + $0xf8] sm:$0xff]
  %v255 = vld [vmem:[%s2 + $0x100] sm:$0xff]
  %v256 = vld [vmem:[%s2 + $0x108] sm:$0xff]
  %v257 = vld [vmem:[%s2 + $0x110] sm:$0xff]
  %v258 = vld [vmem:[%s2 + $0x118] sm:$0xff]
  %v259 = vld [vmem:[%s2 + $0x120] sm:$0xff]
  %v260 = vld [vmem:[%s2 + $0x128] sm:$0xff]
  %v261 = vld [vmem:[%s2 + $0x130] sm:$0xff]
  %v262 = vld [vmem:[%s2 + $0x138] sm:$0xff]
  %v263 = vld [vmem:[%s2 + $0x140] sm:$0xff]
  %v264 = vld [vmem:[%s2 + $0x148] sm:$0xff]
  %v265 = vld [vmem:[%s2 + $0x150] sm:$0xff]
  %v266 = vld [vmem:[%s2 + $0x158] sm:$0xff]
  %v267 = vld [vmem:[%s2 + $0x160] sm:$0xff]
  %v268 = vld [vmem:[%s2 + $0x168] sm:$0xff]
  %v269 = vld [vmem:[%s2 + $0x170] sm:$0xff]
  %v270 = vld [vmem:[%s2 + $0x178] sm:$0xff]
  %v271 = vld [vmem:[%s2 + $0x180] sm:$0xff]
  %v272 = vld [vmem:[%s2 + $0x188] sm:$0xff]
  %v273 = vld [vmem:[%s2 + $0x190] sm:$0xff]
  %v274 = vld [vmem:[%s2 + $0x198] sm:$0xff]
  %v275 = vld [vmem:[%s2 + $0x1a0] sm:$0xff]
  %v276 = vld [vmem:[%s2 + $0x1a8] sm:$0xff]
  %v277 = vld [vmem:[%s2 + $0x1b0] sm:$0xff]
  %v278 = vld [vmem:[%s2 + $0x1b8] sm:$0xff]
  %v279 = vld [vmem:[%s2 + $0x1c0] sm:$0xff]
  %v280 = vld [vmem:[%s2 + $0x1c8] sm:$0xff]
  %v281 = vld [vmem:[%s2 + $0x1d0] sm:$0xff]
  %v282 = vld [vmem:[%s2 + $0x1d8] sm:$0xff]
  %v283 = vld [vmem:[%s2 + $0x1e0] sm:$0xff]
  %v284 = vld [vmem:[%s2 + $0x1e8] sm:$0xff]
  %v285 = vld [vmem:[%s2 + $0x1f0] sm:$0xff]
  %v286 = vld [vmem:[%s2 + $0x1f8] sm:$0xff]
  %287 = vmatprep.subr.mxu0 0.0
  %288 = vmatpush1.msra.mxu0 %v223
  %289 = vmatprep.subr.mxu0 0.0
  %290 = vmatpush1.msra.mxu0 %v224
  %291 = vmatprep.subr.mxu0 0.0
  %292 = vmatpush1.msra.mxu0 %v225
  %293 = vmatprep.subr.mxu0 0.0
  %294 = vmatpush1.msra.mxu0 %v226
  %295 = vmatprep.subr.mxu0 0.0
  %296 = vmatpush1.msra.mxu0 %v227
  %297 = vmatprep.subr.mxu0 0.0
  %298 = vmatpush1.msra.mxu0 %v228
  %299 = vmatprep.subr.mxu0 0.0
  %300 = vmatpush1.msra.mxu0 %v229
  %301 = vmatprep.subr.mxu0 0.0
  %302 = vmatpush1.msra.mxu0 %v230
  %303 = vmatprep.subr.mxu0 0.0
  %304 = vmatpush1.msra.mxu0 %v231
  %305 = vmatprep.subr.mxu0 0.0
  %306 = vmatpush1.msra.mxu0 %v232
  %307 = vmatprep.subr.mxu0 0.0
  %308 = vmatpush1.msra.mxu0 %v233
  %309 = vmatprep.subr.mxu0 0.0
  %310 = vmatpush1.msra.mxu0 %v234
  %311 = vmatprep.subr.mxu0 0.0
  %312 = vmatpush1.msra.mxu0 %v235
  %313 = vmatprep.subr.mxu0 0.0
  %314 = vmatpush1.msra.mxu0 %v236
  %315 = vmatprep.subr.mxu0 0.0
  %316 = vmatpush1.msra.mxu0 %v237
  %317 = vmatprep.subr.mxu0 0.0
  %318 = vmatpush1.msra.mxu0 %v238
  %319 = vmatprep.subr.mxu0 0.0
  %320 = vmatpush1.msra.mxu0 %v239
  %321 = vmatprep.subr.mxu0 0.0
  %322 = vmatpush1.msra.mxu0 %v240
  %323 = vmatprep.subr.mxu0 0.0
  %324 = vmatpush1.msra.mxu0 %v241
  %325 = vmatprep.subr.mxu0 0.0
  %326 = vmatpush1.msra.mxu0 %v242
  %327 = vmatprep.subr.mxu0 0.0
  %328 = vmatpush1.msra.mxu0 %v243
  %329 = vmatprep.subr.mxu0 0.0
  %330 = vmatpush1.msra.mxu0 %v244
  %331 = vmatprep.subr.mxu0 0.0
  %332 = vmatpush1.msra.mxu0 %v245
  %333 = vmatprep.subr.mxu0 0.0
  %334 = vmatpush1.msra.mxu0 %v246
  %335 = vmatprep.subr.mxu0 0.0
  %336 = vmatpush1.msra.mxu0 %v247
  %337 = vmatprep.subr.mxu0 0.0
  %338 = vmatpush1.msra.mxu0 %v248
  %339 = vmatprep.subr.mxu0 0.0
  %340 = vmatpush1.msra.mxu0 %v249
  %341 = vmatprep.subr.mxu0 0.0
  %342 = vmatpush1.msra.mxu0 %v250
  %343 = vmatprep.subr.mxu0 0.0
  %344 = vmatpush1.msra.mxu0 %v251
  %345 = vmatprep.subr.mxu0 0.0
  %346 = vmatpush1.msra.mxu0 %v252
  %347 = vmatprep.subr.mxu0 0.0
  %348 = vmatpush1.msra.mxu0 %v253
  %349 = vmatprep.subr.mxu0 0.0
  %350 = vmatpush1.msra.mxu0 %v254
  %351 = vmatprep.mubr.f32.mxu0 %v172
  %352 = vmatmul.mubr.f32.gmra.mrb[0].mxu0 %v171
  %v353 = vpop.f32.mrb[0].mxu0
  %v354 = vadd.f32 0.0, %v353
  %v355 = vpop.f32.mrb[0].mxu0
  %356 = vmatprep.mubr.f32.mxu0 %v174
  %357 = vmatmul.mubr.f32.gmra.mrb[0].mxu0 %v173
  %v358 = vpop.f32.mrb[0].mxu0
  %v359 = vadd.f32 0.0, %v358
  %v360 = vpop.f32.mrb[0].mxu0
  %361 = vmatprep.mubr.f32.mxu0 %v176
  %362 = vmatmul.mubr.f32.gmra.mrb[0].mxu0 %v175
  %v363 = vpop.f32.mrb[0].mxu0
  %v364 = vadd.f32 0.0, %v363
  %v365 = vpop.f32.mrb[0].mxu0
  %366 = vmatprep.mubr.f32.mxu0 %v178
  %367 = vmatmul.mubr.f32.gmra.mrb[0].mxu0 %v177
  %v368 = vpop.f32.mrb[0].mxu0
  %v369 = vadd.f32 0.0, %v368
  %v370 = vpop.f32.mrb[0].mxu0
  %371 = vmatprep.mubr.f32.mxu0 %v180
  %372 = vmatmul.mubr.f32.gmra.mrb[0].mxu0 %v179
  %v373 = vpop.f32.mrb[0].mxu0
  %v374 = vadd.f32 0.0, %v373
  %v375 = vpop.f32.mrb[0].mxu0
  %376 = vmatprep.mubr.f32.mxu0 %v182
  %377 = vmatmul.mubr.f32.gmra.mrb[0].mxu0 %v181
  %v378 = vpop.f32.mrb[0].mxu0
  %v379 = vadd.f32 0.0, %v378
  %v380 = vpop.f32.mrb[0].mxu0
  %381 = vmatprep.mubr.f32.mxu0 %v184
  %382 = vmatmul.mubr.f32.gmra.mrb[0].mxu0 %v183
  %v383 = vpop.f32.mrb[0].mxu0
  %v384 = vadd.f32 0.0, %v383
  %v385 = vpop.f32.mrb[0].mxu0
  %386 = vmatprep.mubr.f32.mxu0 %v186
  %387 = vmatmul.mubr.f32.gmra.mrb[0].mxu0 %v185
  %v388 = vpop.f32.mrb[0].mxu0
  %v389 = vadd.f32 0.0, %v388
  %v390 = vpop.f32.mrb[0].mxu0
  %391 = vdwg.mxu0
  %392 = vmatprep.subr.mxu0 0.0
  %393 = vmatpush1.msra.mxu0 %v255
  %394 = vmatprep.subr.mxu0 0.0
  %395 = vmatpush1.msra.mxu0 %v256
  %396 = vmatprep.subr.mxu0 0.0
  %397 = vmatpush1.msra.mxu0 %v257
  %398 = vmatprep.subr.mxu0 0.0
  %399 = vmatpush1.msra.mxu0 %v258
  %400 = vmatprep.subr.mxu0 0.0
  %401 = vmatpush1.msra.mxu0 %v259
  %402 = vmatprep.subr.mxu0 0.0
  %403 = vmatpush1.msra.mxu0 %v260
  %404 = vmatprep.subr.mxu0 0.0
  %405 = vmatpush1.msra.mxu0 %v261
  %406 = vmatprep.subr.mxu0 0.0
  %407 = vmatpush1.msra.mxu0 %v262
  %408 = vmatprep.subr.mxu0 0.0
  %409 = vmatpush1.msra.mxu0 %v263
  %410 = vmatprep.subr.mxu0 0.0
  %411 = vmatpush1.msra.mxu0 %v264
  %412 = vmatprep.subr.mxu0 0.0
  %413 = vmatpush1.msra.mxu0 %v265
  %414 = vmatprep.subr.mxu0 0.0
  %415 = vmatpush1.msra.mxu0 %v266
  %416 = vmatprep.subr.mxu0 0.0
  %417 = vmatpush1.msra.mxu0 %v267
  %418 = vmatprep.subr.mxu0 0.0
  %419 = vmatpush1.msra.mxu0 %v268
  %420 = vmatprep.subr.mxu0 0.0
  %421 = vmatpush1.msra.mxu0 %v269
  %422 = vmatprep.subr.mxu0 0.0
  %423 = vmatpush1.msra.mxu0 %v270
  %424 = vmatprep.subr.mxu0 0.0
  %425 = vmatpush1.msra.mxu0 %v271
  %426 = vmatprep.subr.mxu0 0.0
  %427 = vmatpush1.msra.mxu0 %v272
  %428 = vmatprep.subr.mxu0 0.0
  %429 = vmatpush1.msra.mxu0 %v273
  %430 = vmatprep.subr.mxu0 0.0
  %431 = vmatpush1.msra.mxu0 %v274
  %432 = vmatprep.subr.mxu0 0.0
  %433 = vmatpush1.msra.mxu0 %v275
  %434 = vmatprep.subr.mxu0 0.0
  %435 = vmatpush1.msra.mxu0 %v276
  %436 = vmatprep.subr.mxu0 0.0
  %437 = vmatpush1.msra.mxu0 %v277
  %438 = vmatprep.subr.mxu0 0.0
  %439 = vmatpush1.msra.mxu0 %v278
  %440 = vmatprep.subr.mxu0 0.0
  %441 = vmatpush1.msra.mxu0 %v279
  %442 = vmatprep.subr.mxu0 0.0
  %443 = vmatpush1.msra.mxu0 %v280
  %444 = vmatprep.subr.mxu0 0.0
  %445 = vmatpush1.msra.mxu0 %v281
  %446 = vmatprep.subr.mxu0 0.0
  %447 = vmatpush1.msra.mxu0 %v282
  %448 = vmatprep.subr.mxu0 0.0
  %449 = vmatpush1.msra.mxu0 %v283
  %450 = vmatprep.subr.mxu0 0.0
  %451 = vmatpush1.msra.mxu0 %v284
  %452 = vmatprep.subr.mxu0 0.0
  %453 = vmatpush1.msra.mxu0 %v285
  %454 = vmatprep.subr.mxu0 0.0
  %455 = vmatpush1.msra.mxu0 %v286
  %456 = vmatprep.mubr.f32.mxu0 %v221
  %457 = vmatmul.mubr.f32.gmra.mrb[0].mxu0 %v220
  %v458 = vpop.f32.mrb[0].mxu0
  %v459 = vadd.f32 %v354, %v458
  %v460 = vpop.f32.mrb[0].mxu0
  %461 = vmatprep.mubr.f32.mxu0 %v219
  %462 = vmatmul.mubr.f32.gmra.mrb[0].mxu0 %v218
  %v463 = vpop.f32.mrb[0].mxu0
  %v464 = vadd.f32 %v359, %v463
  %v465 = vpop.f32.mrb[0].mxu0
  %466 = vmatprep.mubr.f32.mxu0 %v217
  %467 = vmatmul.mubr.f32.gmra.mrb[0].mxu0 %v216
  %v468 = vpop.f32.mrb[0].mxu0
  %v469 = vadd.f32 %v364, %v468
  %v470 = vpop.f32.mrb[0].mxu0
  %471 = vmatprep.mubr.f32.mxu0 %v215
  %472 = vmatmul.mubr.f32.gmra.mrb[0].mxu0 %v214
  %v473 = vpop.f32.mrb[0].mxu0
  %v474 = vadd.f32 %v369, %v473
  %v475 = vpop.f32.mrb[0].mxu0
  %476 = vmatprep.mubr.f32.mxu0 %v213
  %477 = vmatmul.mubr.f32.gmra.mrb[0].mxu0 %v212
  %v478 = vpop.f32.mrb[0].mxu0
  %v479 = vadd.f32 %v374, %v478
  %v480 = vpop.f32.mrb[0].mxu0
  %481 = vmatprep.mubr.f32.mxu0 %v211
  %482 = vmatmul.mubr.f32.gmra.mrb[0].mxu0 %v210
  %v483 = vpop.f32.mrb[0].mxu0
  %v484 = vadd.f32 %v379, %v483
  %v485 = vpop.f32.mrb[0].mxu0
  %486 = vmatprep.mubr.f32.mxu0 %v209
  %487 = vmatmul.mubr.f32.gmra.mrb[0].mxu0 %v208
  %v488 = vpop.f32.mrb[0].mxu0
  %v489 = vadd.f32 %v384, %v488
  %v490 = vpop.f32.mrb[0].mxu0
  %491 = vmatprep.mubr.f32.mxu0 %v207
  %492 = vmatmul.mubr.f32.gmra.mrb[0].mxu0 %v206
  %v493 = vpop.f32.mrb[0].mxu0
  %v494 = vadd.f32 %v389, %v493
  %v495 = vpop.f32.mrb[0].mxu0
  %496 = vdwg.mxu0
  %v498 = vlaneseq
  %v499 = vshrl.u32 %v498, 7
  %v500 = vsub.s32 0, %v499
  %v501 = vrot.slane %v222, %v500
  %v503 = vadd.f32 %v501, %v459
  %v504 = vadd.f32 %v501, %v464
  %v505 = vadd.f32 %v501, %v469
  %v506 = vadd.f32 %v501, %v474
  %v507 = vadd.f32 %v501, %v479
  %v508 = vadd.f32 %v501, %v484
  %v509 = vadd.f32 %v501, %v489
  %v510 = vadd.f32 %v501, %v494
  %v511 = vmax.f32 %v503, 0.0
  %v512 = vmax.f32 %v504, 0.0
  %v513 = vmax.f32 %v505, 0.0
  %v514 = vmax.f32 %v506, 0.0
  %v515 = vmax.f32 %v507, 0.0
  %v516 = vmax.f32 %v508, 0.0
  %v517 = vmax.f32 %v509, 0.0
  %v518 = vmax.f32 %v510, 0.0
  %519 = vst [vmem:[%s4] sm:$0xff] %v511
  %520 = vst [vmem:[%s4 + $0x8] sm:$0xff] %v512
  %521 = vst [vmem:[%s4 + $0x10] sm:$0xff] %v513
  %522 = vst [vmem:[%s4 + $0x18] sm:$0xff] %v514
  %523 = vst [vmem:[%s4 + $0x20] sm:$0xff] %v515
  %524 = vst [vmem:[%s4 + $0x28] sm:$0xff] %v516
  %525 = vst [vmem:[%s4 + $0x30] sm:$0xff] %v517
  %526 = vst [vmem:[%s4 + $0x38] sm:$0xff] %v518
  // Predicated region
  $region18: #{model_forward.1} parent=0 // pred_check
    _
  $region19: #{model_forward.1} parent=0 // pred_check_branch
    %528 = sbr.rel (0) target = $region21
  $region20: #{model_forward.1} parent=0 // pred_region
    _
  $region21: #{model_forward.1} parent=0 // pred_fallthru
    _
  // Predicated region
  $region22: #{model_forward.1} parent=0 // pred_check
    _
  $region23: #{model_forward.1} parent=0 // pred_check_branch
    %530 = sbr.rel (0) target = $region25
  $region24: #{model_forward.1} parent=0 // pred_region
    _
  $region25: #{model_forward.1} parent=0 // pred_fallthru
    _

</llo_original>
